<compile_context>
chip_gen: v5e
topology: v5e:2x2
jax: 0.10.0
libtpu: 0.0.40
codegen_flags: <defaults>
</compile_context>

<pallas_src>
import jax
import jax.numpy as jnp
from jax.experimental import pallas as pl
from jax.experimental.pallas import tpu as pltpu


_LANE = 1024     # lane-dense last dim (multiple of 128)
_MAX_TM = 1024   # up to 1024 x 1024 x 4B = 4 MiB tile; in+out double-buffered = 16 MiB


def _int_pow(x, n):
    """x**n for a static non-negative integer n via repeated squaring (VPU only)."""
    if n == 0:
        return jnp.ones_like(x)
    result = None
    base = x
    while n > 0:
        if n & 1:
            result = base if result is None else result * base
        n >>= 1
        if n:
            base = base * base
    return result


def _make_kernel(r_max, p):
    """Elementwise kernel with p / r_max folded in as compile-time constants."""
    r_max_f = float(r_max)
    inv_r = 1.0 / r_max_f
    pf = float(p)
    c1 = (pf + 1.0) * (pf + 2.0) / 2.0
    c2 = pf * (pf + 2.0)
    c3 = pf * (pf + 1.0) / 2.0
    p_int = int(round(pf))
    integer_p = abs(pf - p_int) < 1e-12 and p_int >= 0

    def kernel(x_ref, o_ref):
        x = x_ref[...]
        xr = x * inv_r
        if integer_p:
            xp = _int_pow(xr, p_int)      # (x/r)^p via multiplies only
        else:
            xp = jnp.power(xr, pf)        # fallback keeps torch.pow parity
        # Horner form of 1 - c1*xp + c2*xp*xr - c3*xp*xr^2
        env = 1.0 - xp * (c1 - xr * (c2 - c3 * xr))
        # where() instead of env*(x<r) avoids inf*0 -> NaN for pathological x
        o_ref[...] = jnp.where(x < r_max_f, env, 0.0).astype(o_ref.dtype)

    return kernel


def _envelope_jnp(x, r_max, p):
    """Fused pure-jnp path for tiny inputs (same math / masking as the kernel)."""
    pf = float(p)
    r_max_f = float(r_max)
    c1 = (pf + 1.0) * (pf + 2.0) / 2.0
    c2 = pf * (pf + 2.0)
    c3 = pf * (pf + 1.0) / 2.0
    xr = x * (1.0 / r_max_f)
    xp = jnp.power(xr, pf)
    env = 1.0 - xp * (c1 - xr * (c2 - c3 * xr))
    return jnp.where(x < r_max_f, env, 0.0)


def _choose_tm(rows):
    """Pick tile rows: big (amortize per-step overhead) but keep >= ~4 grid blocks
    for mid-size inputs so both v7x TensorCores get work."""
    tm = _MAX_TM
    while tm > 64 and rows < 4 * tm:
        tm //= 2
    if rows <= tm:
        return rows          # single block spanning the full dim (allowed even if not %8)
    return tm                # multiple of 8; ragged last block is masked by Pallas


def _pallas_apply(x2d, r_max, p, out_dtype, alias_input):
    rows, lane = x2d.shape
    tm = _choose_tm(rows)
    kernel = _make_kernel(r_max, p)
    alias = {0: 0} if (alias_input and jnp.dtype(out_dtype) == jnp.dtype(x2d.dtype)) else {}
    return pl.pallas_call(
        kernel,
        out_shape=jax.ShapeDtypeStruct((rows, lane), out_dtype),
        grid_spec=pltpu.PrefetchScalarGridSpec(
            num_scalar_prefetch=0,
            grid=(pl.cdiv(rows, tm),),
            in_specs=[pl.BlockSpec((tm, lane), lambda i: (i, 0))],
            out_specs=pl.BlockSpec((tm, lane), lambda i: (i, 0)),
        ),
        compiler_params=pltpu.CompilerParams(
            dimension_semantics=("parallel",),
            vmem_limit_bytes=32 * 1024 * 1024,   # safe on v5e/v6e/v7x, fits 1024-row tiles
        ),
        input_output_aliases=alias,
    )(x2d)


def polynomial_cutoff(x, r_max, p=6.0, *, min_pallas_elems=8192, out_dtype=jnp.float32):
    """Evaluate the polynomial cutoff on a distance array of any shape."""
    x = jnp.asarray(x, jnp.float32)
    orig_shape = x.shape
    n = int(x.size)

    # Tiny input: pallas launch / pad overhead dominates -> let XLA fuse the math.
    if n == 0 or n < min_pallas_elems:
        return _envelope_jnp(x, r_max, p).astype(out_dtype)

    lane = _LANE
    rows = pl.cdiv(n, lane)
    padded = (rows * lane) != n

    flat = x.reshape(-1)                              # free (contiguous row-major)
    if padded:
        flat = jnp.pad(flat, (0, rows * lane - n))    # < LANE elements of pad
    x2 = flat.reshape(rows, lane)                     # free bitcast when not padded

    out2 = _pallas_apply(x2, r_max, p, out_dtype, alias_input=padded)

    if padded:
        return out2.reshape(-1)[:n].reshape(orig_shape)
    return out2.reshape(orig_shape)                   # free bitcast


def polynomial_cutoff_ref(x, r_max, p=6.0):
    """Pure-JAX reference mirroring the PyTorch forward exactly."""
    x = jnp.asarray(x, jnp.float32)
    xr = x / r_max
    env = (
        1.0
        - (p + 1.0) * (p + 2.0) / 2.0 * jnp.power(xr, p)
        + p * (p + 2.0) * jnp.power(xr, p + 1.0)
        - p * (p + 1.0) / 2.0 * jnp.power(xr, p + 2.0)
    )
    return env * (x < r_max).astype(jnp.float32)


if __name__ == "__main__":
    r_max = 3.5
    p = 6.0

    key = jax.random.PRNGKey(0)
    k1, k2, k3 = jax.random.split(key, 3)

    # (a) lane-aligned size (40*1024): Pallas fast path, zero pad/slice overhead.
    x_aligned = jax.random.uniform(k1, (40, 1024), jnp.float32, 0.0, 2.0 * r_max)
    # (b) ragged size (33*1000): Pallas path with minimal (<1024-elem) pad + slice.
    x_ragged = jax.random.uniform(k2, (33, 1000), jnp.float32, 0.0, 2.0 * r_max)
    # (c) tiny vector: fused pure-jnp fallback path.
    x_small = jax.random.uniform(k3, (1000,), jnp.float32, 0.0, 2.0 * r_max)

    fn = jax.jit(polynomial_cutoff, static_argnums=(1, 2))

    for x in (x_aligned, x_ragged, x_small):
        out = jax.block_until_ready(fn(x, r_max, p))
        ref = polynomial_cutoff_ref(x, r_max, p)
        assert out.shape == x.shape and out.dtype == jnp.float32
        assert jnp.allclose(out, ref, atol=1e-5, rtol=1e-5)

    print("KERNEL_OK")
</pallas_src>

<mosaic_0001>
module attributes {stable_mosaic.version = 11 : i64} {
  func.func @kernel(%arg0: i32, %arg1: memref<40x1024xf32, #tpu.memory_space<vmem>>, %arg2: memref<40x1024xf32, #tpu.memory_space<vmem>>) attributes {dimension_semantics = [#tpu.dimension_semantics<parallel>], iteration_bounds = array<i64: 1>, scalar_prefetch = 0 : i64, scratch_operands = 0 : i64, tpu.core_type = #tpu.core_type<tc>, window_params = [{transform_indices = @transform_0, window_bounds = array<i64: 40, 1024>}, {transform_indices = @transform_1, window_bounds = array<i64: 40, 1024>}]} {
    %c0 = arith.constant 0 : index
    %c0_0 = arith.constant 0 : index
    %0 = vector.load %arg1[%c0, %c0_0] : memref<40x1024xf32, #tpu.memory_space<vmem>>, vector<40x1024xf32>
    %cst = arith.constant 0.285714298 : f32
    %1 = vector.broadcast %cst : f32 to vector<40x1024xf32>
    %2 = arith.mulf %0, %1 : vector<40x1024xf32>
    %3 = arith.mulf %2, %2 : vector<40x1024xf32>
    %4 = arith.mulf %3, %3 : vector<40x1024xf32>
    %5 = arith.mulf %3, %4 : vector<40x1024xf32>
    %cst_1 = arith.constant 2.100000e+01 : f32
    %6 = vector.broadcast %cst_1 : f32 to vector<40x1024xf32>
    %7 = arith.mulf %6, %2 : vector<40x1024xf32>
    %cst_2 = arith.constant 4.800000e+01 : f32
    %8 = vector.broadcast %cst_2 : f32 to vector<40x1024xf32>
    %9 = arith.subf %8, %7 : vector<40x1024xf32>
    %10 = arith.mulf %2, %9 : vector<40x1024xf32>
    %cst_3 = arith.constant 2.800000e+01 : f32
    %11 = vector.broadcast %cst_3 : f32 to vector<40x1024xf32>
    %12 = arith.subf %11, %10 : vector<40x1024xf32>
    %13 = arith.mulf %5, %12 : vector<40x1024xf32>
    %cst_4 = arith.constant 1.000000e+00 : f32
    %14 = vector.broadcast %cst_4 : f32 to vector<40x1024xf32>
    %15 = arith.subf %14, %13 : vector<40x1024xf32>
    %cst_5 = arith.constant 3.500000e+00 : f32
    %16 = vector.broadcast %cst_5 : f32 to vector<40x1024xf32>
    %17 = arith.cmpf olt, %0, %16 : vector<40x1024xf32>
    %cst_6 = arith.constant 0.000000e+00 : f32
    %18 = vector.broadcast %cst_6 : f32 to vector<40x1024xf32>
    %19 = arith.select %17, %15, %18 : vector<40x1024xi1>, vector<40x1024xf32>
    %c0_7 = arith.constant 0 : index
    %c0_8 = arith.constant 0 : index
    %20 = vector.load %arg2[%c0_7, %c0_8] : memref<40x1024xf32, #tpu.memory_space<vmem>>, vector<40x1024xf32>
    tpu.vector_store %arg2[%c0_7, %c0_8], %19 {strides = array<i32>} : memref<40x1024xf32, #tpu.memory_space<vmem>>, vector<40x1024xf32>,
    return
  }
  func.func @transform_0(%arg0: i32) -> (i32, i32) {
    %c0_i32 = arith.constant 0 : i32
    %c0_i32_0 = arith.constant 0 : i32
    return %arg0, %c0_i32 : i32, i32
  }
  func.func @transform_1(%arg0: i32) -> (i32, i32) {
    %c0_i32 = arith.constant 0 : i32
    %c0_i32_0 = arith.constant 0 : i32
    return %arg0, %c0_i32 : i32, i32
  }
}

</mosaic_0001>

<llo_original>
// kernel: polynomial_cutoff.1
$region0: #{polynomial_cutoff.1}
  #allocation0 [shape = 'u32[]', space=smem, size = 0x4, offset = 0x4, fixed_abs, tag = 'smem constant byte address 0x4 - core index']
  #allocation1 [shape = 'u32[72,128]{1,0:T(1,128)}', space=vmem, size = 0x9000, scoped, tag = 'internal scratch']
  %s0 = inlined_call_operand.hbm [shape: f32[40,1024], index: 0, kind: input, shape index: {}]
  %s1 = inlined_call_operand.hbm [shape: f32[40,1024], index: 1, kind: output, shape index: {}]
  %s2 = sld [smem:[#allocation0]]
  $region18: #{polynomial_cutoff.1} parent=0
    _
  %s4 = ssub.s32 1, %s2
  %s5 = scalar_select 0, %s4, %s2
  $region1: #{polynomial_cutoff.1} parent=0
    #allocation2 [shape = 'u8[163840]{0}', space=vmem, size = 0x28000, scoped, tag = 'input window, operand 0, single buffered']
    #allocation3 [shape = 's32[1]{0}', space=sflag, size = 0x4, scoped, tag = 'scoped memory for polynomial_cutoff.1']
    #allocation4 [shape = 's32[1]{0}', space=sflag, size = 0x4, scoped, tag = 'scoped memory for polynomial_cutoff.1']
    #allocation5 [shape = 'u8[163840]{0}', space=vmem, size = 0x28000, scoped, tag = 'output window, operand 0, single buffered']
    %6 = vsyncpa [#allocation3], 0
    %7 = vsyncpa [#allocation4], 0
    // Predicated region
    $region2: #{polynomial_cutoff.1} parent=1 // pred_check
      _
    $region3: #{polynomial_cutoff.1} parent=1 // pred_check_branch
      %9 = sbr.rel (0) target = $region5
    $region4: #{polynomial_cutoff.1} parent=1 // pred_region
      %11 = vsyncadd [#allocation3], 0
      %s12 = sshll.u32 %s0, 4
      %s13 = int_to_ptr.hbm [resolvable:$true] %s12
      %s14 = sshll.u32 [#allocation2], 4
      %s15 = int_to_ptr.vmem [resolvable:$true] %s14
      %20 = dma.hbm_to_vmem [thread:$0]  %s13, 5120, %s15, [#allocation3], 1024, 1024, 64
    $region5: #{polynomial_cutoff.1} parent=1 // pred_fallthru
      _
    // Predicated region
    $region6: #{polynomial_cutoff.1} parent=1 // pred_check
      _
    $region7: #{polynomial_cutoff.1} parent=1 // pred_check_branch
      %22 = sbr.rel (0) target = $region9
    $region8: #{polynomial_cutoff.1} parent=1 // pred_region
      %24 = dma.done [#allocation3], 5120
    $region9: #{polynomial_cutoff.1} parent=1 // pred_fallthru
      _
    %v25 = vld [vmem:[#allocation2] sm:$0xff]
    %v26 = vld [vmem:[#allocation2 + $0x8] sm:$0xff]
    %v27 = vld [vmem:[#allocation2 + $0x10] sm:$0xff]
    %v28 = vld [vmem:[#allocation2 + $0x18] sm:$0xff]
    %v29 = vld [vmem:[#allocation2 + $0x20] sm:$0xff]
    %v30 = vld [vmem:[#allocation2 + $0x28] sm:$0xff]
    %v31 = vld [vmem:[#allocation2 + $0x30] sm:$0xff]
    %v32 = vld [vmem:[#allocation2 + $0x38] sm:$0xff]
    %v33 = vld [vmem:[#allocation2 + $0x40] sm:$0xff]
    %v34 = vld [vmem:[#allocation2 + $0x48] sm:$0xff]
    %v35 = vld [vmem:[#allocation2 + $0x50] sm:$0xff]
    %v36 = vld [vmem:[#allocation2 + $0x58] sm:$0xff]
    %v37 = vld [vmem:[#allocation2 + $0x60] sm:$0xff]
    %v38 = vld [vmem:[#allocation2 + $0x68] sm:$0xff]
    %v39 = vld [vmem:[#allocation2 + $0x70] sm:$0xff]
    %v40 = vld [vmem:[#allocation2 + $0x78] sm:$0xff]
    %v41 = vld [vmem:[#allocation2 + $0x80] sm:$0xff]
    %v42 = vld [vmem:[#allocation2 + $0x88] sm:$0xff]
    %v43 = vld [vmem:[#allocation2 + $0x90] sm:$0xff]
    %v44 = vld [vmem:[#allocation2 + $0x98] sm:$0xff]
    %v45 = vld [vmem:[#allocation2 + $0xa0] sm:$0xff]
    %v46 = vld [vmem:[#allocation2 + $0xa8] sm:$0xff]
    %v47 = vld [vmem:[#allocation2 + $0xb0] sm:$0xff]
    %v48 = vld [vmem:[#allocation2 + $0xb8] sm:$0xff]
    %v49 = vld [vmem:[#allocation2 + $0xc0] sm:$0xff]
    %v50 = vld [vmem:[#allocation2 + $0xc8] sm:$0xff]
    %v51 = vld [vmem:[#allocation2 + $0xd0] sm:$0xff]
    %v52 = vld [vmem:[#allocation2 + $0xd8] sm:$0xff]
    %v53 = vld [vmem:[#allocation2 + $0xe0] sm:$0xff]
    %v54 = vld [vmem:[#allocation2 + $0xe8] sm:$0xff]
    %v55 = vld [vmem:[#allocation2 + $0xf0] sm:$0xff]
    %v56 = vld [vmem:[#allocation2 + $0xf8] sm:$0xff]
    %v57 = vld [vmem:[#allocation2 + $0x100] sm:$0xff]
    %v58 = vld [vmem:[#allocation2 + $0x108] sm:$0xff]
    %v59 = vld [vmem:[#allocation2 + $0x110] sm:$0xff]
    %v60 = vld [vmem:[#allocation2 + $0x118] sm:$0xff]
    %v61 = vld [vmem:[#allocation2 + $0x120] sm:$0xff]
    %v62 = vld [vmem:[#allocation2 + $0x128] sm:$0xff]
    %v63 = vld [vmem:[#allocation2 + $0x130] sm:$0xff]
    %v64 = vld [vmem:[#allocation2 + $0x138] sm:$0xff]
    %v65 = vmul.f32 %v25, 0.2857143
    %v66 = vmul.f32 %v26, 0.2857143
    %v67 = vmul.f32 %v27, 0.2857143
    %v68 = vmul.f32 %v28, 0.2857143
    %v69 = vmul.f32 %v29, 0.2857143
    %v70 = vmul.f32 %v30, 0.2857143
    %v71 = vmul.f32 %v31, 0.2857143
    %v72 = vmul.f32 %v32, 0.2857143
    %v73 = vmul.f32 %v33, 0.2857143
    %v74 = vmul.f32 %v34, 0.2857143
    %v75 = vmul.f32 %v35, 0.2857143
    %v76 = vmul.f32 %v36, 0.2857143
    %v77 = vmul.f32 %v37, 0.2857143
    %v78 = vmul.f32 %v38, 0.2857143
    %v79 = vmul.f32 %v39, 0.2857143
    %v80 = vmul.f32 %v40, 0.2857143
    %v81 = vmul.f32 %v41, 0.2857143
    %v82 = vmul.f32 %v42, 0.2857143
    %v83 = vmul.f32 %v43, 0.2857143
    %v84 = vmul.f32 %v44, 0.2857143
    %v85 = vmul.f32 %v45, 0.2857143
    %v86 = vmul.f32 %v46, 0.2857143
    %v87 = vmul.f32 %v47, 0.2857143
    %v88 = vmul.f32 %v48, 0.2857143
    %v89 = vmul.f32 %v49, 0.2857143
    %v90 = vmul.f32 %v50, 0.2857143
    %v91 = vmul.f32 %v51, 0.2857143
    %v92 = vmul.f32 %v52, 0.2857143
    %v93 = vmul.f32 %v53, 0.2857143
    %v94 = vmul.f32 %v54, 0.2857143
    %v95 = vmul.f32 %v55, 0.2857143
    %v96 = vmul.f32 %v56, 0.2857143
    %v97 = vmul.f32 %v57, 0.2857143
    %v98 = vmul.f32 %v58, 0.2857143
    %v99 = vmul.f32 %v59, 0.2857143
    %v100 = vmul.f32 %v60, 0.2857143
    %v101 = vmul.f32 %v61, 0.2857143
    %v102 = vmul.f32 %v62, 0.2857143
    %v103 = vmul.f32 %v63, 0.2857143
    %v104 = vmul.f32 %v64, 0.2857143
    %v105 = vmul.f32 %v65, %v65
    %v106 = vmul.f32 %v66, %v66
    %v107 = vmul.f32 %v67, %v67
    %v108 = vmul.f32 %v68, %v68
    %v109 = vmul.f32 %v69, %v69
    %v110 = vmul.f32 %v70, %v70
    %v111 = vmul.f32 %v71, %v71
    %v112 = vmul.f32 %v72, %v72
    %v113 = vmul.f32 %v73, %v73
    %v114 = vmul.f32 %v74, %v74
    %v115 = vmul.f32 %v75, %v75
    %v116 = vmul.f32 %v76, %v76
    %v117 = vmul.f32 %v77, %v77
    %v118 = vmul.f32 %v78, %v78
    %v119 = vmul.f32 %v79, %v79
    %v120 = vmul.f32 %v80, %v80
    %v121 = vmul.f32 %v81, %v81
    %v122 = vmul.f32 %v82, %v82
    %v123 = vmul.f32 %v83, %v83
    %v124 = vmul.f32 %v84, %v84
    %v125 = vmul.f32 %v85, %v85
    %v126 = vmul.f32 %v86, %v86
    %v127 = vmul.f32 %v87, %v87
    %v128 = vmul.f32 %v88, %v88
    %v129 = vmul.f32 %v89, %v89
    %v130 = vmul.f32 %v90, %v90
    %v131 = vmul.f32 %v91, %v91
    %v132 = vmul.f32 %v92, %v92
    %v133 = vmul.f32 %v93, %v93
    %v134 = vmul.f32 %v94, %v94
    %v135 = vmul.f32 %v95, %v95
    %v136 = vmul.f32 %v96, %v96
    %v137 = vmul.f32 %v97, %v97
    %v138 = vmul.f32 %v98, %v98
    %v139 = vmul.f32 %v99, %v99
    %v140 = vmul.f32 %v100, %v100
    %v141 = vmul.f32 %v101, %v101
    %v142 = vmul.f32 %v102, %v102
    %v143 = vmul.f32 %v103, %v103
    %v144 = vmul.f32 %v104, %v104
    %v145 = vmul.f32 %v105, %v105
    %v146 = vmul.f32 %v106, %v106
    %v147 = vmul.f32 %v107, %v107
    %v148 = vmul.f32 %v108, %v108
    %v149 = vmul.f32 %v109, %v109
    %v150 = vmul.f32 %v110, %v110
    %v151 = vmul.f32 %v111, %v111
    %v152 = vmul.f32 %v112, %v112
    %v153 = vmul.f32 %v113, %v113
    %v154 = vmul.f32 %v114, %v114
    %v155 = vmul.f32 %v115, %v115
    %v156 = vmul.f32 %v116, %v116
    %v157 = vmul.f32 %v117, %v117
    %v158 = vmul.f32 %v118, %v118
    %v159 = vmul.f32 %v119, %v119
    %v160 = vmul.f32 %v120, %v120
    %v161 = vmul.f32 %v121, %v121
    %v162 = vmul.f32 %v122, %v122
    %v163 = vmul.f32 %v123, %v123
    %v164 = vmul.f32 %v124, %v124
    %v165 = vmul.f32 %v125, %v125
    %v166 = vmul.f32 %v126, %v126
    %v167 = vmul.f32 %v127, %v127
    %v168 = vmul.f32 %v128, %v128
    %v169 = vmul.f32 %v129, %v129
    %v170 = vmul.f32 %v130, %v130
    %v171 = vmul.f32 %v131, %v131
    %v172 = vmul.f32 %v132, %v132
    %v173 = vmul.f32 %v133, %v133
    %v174 = vmul.f32 %v134, %v134
    %v175 = vmul.f32 %v135, %v135
    %v176 = vmul.f32 %v136, %v136
    %v177 = vmul.f32 %v137, %v137
    %v178 = vmul.f32 %v138, %v138
    %v179 = vmul.f32 %v139, %v139
    %v180 = vmul.f32 %v140, %v140
    %v181 = vmul.f32 %v141, %v141
    %v182 = vmul.f32 %v142, %v142
    %v183 = vmul.f32 %v143, %v143
    %v184 = vmul.f32 %v144, %v144
    %v185 = vmul.f32 %v105, %v145
    %v186 = vmul.f32 %v106, %v146
    %v187 = vmul.f32 %v107, %v147
    %v188 = vmul.f32 %v108, %v148
    %v189 = vmul.f32 %v109, %v149
    %v190 = vmul.f32 %v110, %v150
    %v191 = vmul.f32 %v111, %v151
    %v192 = vmul.f32 %v112, %v152
    %v193 = vmul.f32 %v113, %v153
    %v194 = vmul.f32 %v114, %v154
    %v195 = vmul.f32 %v115, %v155
    %v196 = vmul.f32 %v116, %v156
    %v197 = vmul.f32 %v117, %v157
    %v198 = vmul.f32 %v118, %v158
    %v199 = vmul.f32 %v119, %v159
    %v200 = vmul.f32 %v120, %v160
    %v201 = vmul.f32 %v121, %v161
    %v202 = vmul.f32 %v122, %v162
    %v203 = vmul.f32 %v123, %v163
    %v204 = vmul.f32 %v124, %v164
    %v205 = vmul.f32 %v125, %v165
    %v206 = vmul.f32 %v126, %v166
    %v207 = vmul.f32 %v127, %v167
    %v208 = vmul.f32 %v128, %v168
    %v209 = vmul.f32 %v129, %v169
    %v210 = vmul.f32 %v130, %v170
    %v211 = vmul.f32 %v131, %v171
    %v212 = vmul.f32 %v132, %v172
    %v213 = vmul.f32 %v133, %v173
    %v214 = vmul.f32 %v134, %v174
    %v215 = vmul.f32 %v135, %v175
    %v216 = vmul.f32 %v136, %v176
    %v217 = vmul.f32 %v137, %v177
    %v218 = vmul.f32 %v138, %v178
    %v219 = vmul.f32 %v139, %v179
    %v220 = vmul.f32 %v140, %v180
    %v221 = vmul.f32 %v141, %v181
    %v222 = vmul.f32 %v142, %v182
    %v223 = vmul.f32 %v143, %v183
    %v224 = vmul.f32 %v144, %v184
    %v225 = vmul.f32 %v65, 21.0
    %v226 = vmul.f32 %v66, 21.0
    %v227 = vmul.f32 %v67, 21.0
    %v228 = vmul.f32 %v68, 21.0
    %v229 = vmul.f32 %v69, 21.0
    %v230 = vmul.f32 %v70, 21.0
    %v231 = vmul.f32 %v71, 21.0
    %v232 = vmul.f32 %v72, 21.0
    %v233 = vmul.f32 %v73, 21.0
    %v234 = vmul.f32 %v74, 21.0
    %v235 = vmul.f32 %v75, 21.0
    %v236 = vmul.f32 %v76, 21.0
    %v237 = vmul.f32 %v77, 21.0
    %v238 = vmul.f32 %v78, 21.0
    %v239 = vmul.f32 %v79, 21.0
    %v240 = vmul.f32 %v80, 21.0
    %v241 = vmul.f32 %v81, 21.0
    %v242 = vmul.f32 %v82, 21.0
    %v243 = vmul.f32 %v83, 21.0
    %v244 = vmul.f32 %v84, 21.0
    %v245 = vmul.f32 %v85, 21.0
    %v246 = vmul.f32 %v86, 21.0
    %v247 = vmul.f32 %v87, 21.0
    %v248 = vmul.f32 %v88, 21.0
    %v249 = vmul.f32 %v89, 21.0
    %v250 = vmul.f32 %v90, 21.0
    %v251 = vmul.f32 %v91, 21.0
    %v252 = vmul.f32 %v92, 21.0
    %v253 = vmul.f32 %v93, 21.0
    %v254 = vmul.f32 %v94, 21.0
    %v255 = vmul.f32 %v95, 21.0
    %v256 = vmul.f32 %v96, 21.0
    %v257 = vmul.f32 %v97, 21.0
    %v258 = vmul.f32 %v98, 21.0
    %v259 = vmul.f32 %v99, 21.0
    %v260 = vmul.f32 %v100, 21.0
    %v261 = vmul.f32 %v101, 21.0
    %v262 = vmul.f32 %v102, 21.0
    %v263 = vmul.f32 %v103, 21.0
    %v264 = vmul.f32 %v104, 21.0
    %v265 = vsub.f32 48.0, %v225
    %v266 = vsub.f32 48.0, %v226
    %v267 = vsub.f32 48.0, %v227
    %v268 = vsub.f32 48.0, %v228
    %v269 = vsub.f32 48.0, %v229
    %v270 = vsub.f32 48.0, %v230
    %v271 = vsub.f32 48.0, %v231
    %v272 = vsub.f32 48.0, %v232
    %v273 = vsub.f32 48.0, %v233
    %v274 = vsub.f32 48.0, %v234
    %v275 = vsub.f32 48.0, %v235
    %v276 = vsub.f32 48.0, %v236
    %v277 = vsub.f32 48.0, %v237
    %v278 = vsub.f32 48.0, %v238
    %v279 = vsub.f32 48.0, %v239
    %v280 = vsub.f32 48.0, %v240
    %v281 = vsub.f32 48.0, %v241
    %v282 = vsub.f32 48.0, %v242
    %v283 = vsub.f32 48.0, %v243
    %v284 = vsub.f32 48.0, %v244
    %v285 = vsub.f32 48.0, %v245
    %v286 = vsub.f32 48.0, %v246
    %v287 = vsub.f32 48.0, %v247
    %v288 = vsub.f32 48.0, %v248
    %v289 = vsub.f32 48.0, %v249
    %v290 = vsub.f32 48.0, %v250
    %v291 = vsub.f32 48.0, %v251
    %v292 = vsub.f32 48.0, %v252
    %v293 = vsub.f32 48.0, %v253
    %v294 = vsub.f32 48.0, %v254
    %v295 = vsub.f32 48.0, %v255
    %v296 = vsub.f32 48.0, %v256
    %v297 = vsub.f32 48.0, %v257
    %v298 = vsub.f32 48.0, %v258
    %v299 = vsub.f32 48.0, %v259
    %v300 = vsub.f32 48.0, %v260
    %v301 = vsub.f32 48.0, %v261
    %v302 = vsub.f32 48.0, %v262
    %v303 = vsub.f32 48.0, %v263
    %v304 = vsub.f32 48.0, %v264
    %v305 = vmul.f32 %v65, %v265
    %v306 = vmul.f32 %v66, %v266
    %v307 = vmul.f32 %v67, %v267
    %v308 = vmul.f32 %v68, %v268
    %v309 = vmul.f32 %v69, %v269
    %v310 = vmul.f32 %v70, %v270
    %v311 = vmul.f32 %v71, %v271
    %v312 = vmul.f32 %v72, %v272
    %v313 = vmul.f32 %v73, %v273
    %v314 = vmul.f32 %v74, %v274
    %v315 = vmul.f32 %v75, %v275
    %v316 = vmul.f32 %v76, %v276
    %v317 = vmul.f32 %v77, %v277
    %v318 = vmul.f32 %v78, %v278
    %v319 = vmul.f32 %v79, %v279
    %v320 = vmul.f32 %v80, %v280
    %v321 = vmul.f32 %v81, %v281
    %v322 = vmul.f32 %v82, %v282
    %v323 = vmul.f32 %v83, %v283
    %v324 = vmul.f32 %v84, %v284
    %v325 = vmul.f32 %v85, %v285
    %v326 = vmul.f32 %v86, %v286
    %v327 = vmul.f32 %v87, %v287
    %v328 = vmul.f32 %v88, %v288
    %v329 = vmul.f32 %v89, %v289
    %v330 = vmul.f32 %v90, %v290
    %v331 = vmul.f32 %v91, %v291
    %v332 = vmul.f32 %v92, %v292
    %v333 = vmul.f32 %v93, %v293
    %v334 = vmul.f32 %v94, %v294
    %v335 = vmul.f32 %v95, %v295
    %v336 = vmul.f32 %v96, %v296
    %v337 = vmul.f32 %v97, %v297
    %v338 = vmul.f32 %v98, %v298
    %v339 = vmul.f32 %v99, %v299
    %v340 = vmul.f32 %v100, %v300
    %v341 = vmul.f32 %v101, %v301
    %v342 = vmul.f32 %v102, %v302
    %v343 = vmul.f32 %v103, %v303
    %v344 = vmul.f32 %v104, %v304
    %v345 = vsub.f32 28.0, %v305
    %v346 = vsub.f32 28.0, %v306
    %v347 = vsub.f32 28.0, %v307
    %v348 = vsub.f32 28.0, %v308
    %v349 = vsub.f32 28.0, %v309
    %v350 = vsub.f32 28.0, %v310
    %v351 = vsub.f32 28.0, %v311
    %v352 = vsub.f32 28.0, %v312
    %v353 = vsub.f32 28.0, %v313
    %v354 = vsub.f32 28.0, %v314
    %v355 = vsub.f32 28.0, %v315
    %v356 = vsub.f32 28.0, %v316
    %v357 = vsub.f32 28.0, %v317
    %v358 = vsub.f32 28.0, %v318
    %v359 = vsub.f32 28.0, %v319
    %v360 = vsub.f32 28.0, %v320
    %v361 = vsub.f32 28.0, %v321
    %v362 = vsub.f32 28.0, %v322
    %v363 = vsub.f32 28.0, %v323
    %v364 = vsub.f32 28.0, %v324
    %v365 = vsub.f32 28.0, %v325
    %v366 = vsub.f32 28.0, %v326
    %v367 = vsub.f32 28.0, %v327
    %v368 = vsub.f32 28.0, %v328
    %v369 = vsub.f32 28.0, %v329
    %v370 = vsub.f32 28.0, %v330
    %v371 = vsub.f32 28.0, %v331
    %v372 = vsub.f32 28.0, %v332
    %v373 = vsub.f32 28.0, %v333
    %v374 = vsub.f32 28.0, %v334
    %v375 = vsub.f32 28.0, %v335
    %v376 = vsub.f32 28.0, %v336
    %v377 = vsub.f32 28.0, %v337
    %v378 = vsub.f32 28.0, %v338
    %v379 = vsub.f32 28.0, %v339
    %v380 = vsub.f32 28.0, %v340
    %v381 = vsub.f32 28.0, %v341
    %v382 = vsub.f32 28.0, %v342
    %v383 = vsub.f32 28.0, %v343
    %v384 = vsub.f32 28.0, %v344
    %v385 = vmul.f32 %v185, %v345
    %v386 = vmul.f32 %v186, %v346
    %v387 = vmul.f32 %v187, %v347
    %v388 = vmul.f32 %v188, %v348
    %v389 = vmul.f32 %v189, %v349
    %v390 = vmul.f32 %v190, %v350
    %v391 = vmul.f32 %v191, %v351
    %v392 = vmul.f32 %v192, %v352
    %v393 = vmul.f32 %v193, %v353
    %v394 = vmul.f32 %v194, %v354
    %v395 = vmul.f32 %v195, %v355
    %v396 = vmul.f32 %v196, %v356
    %v397 = vmul.f32 %v197, %v357
    %v398 = vmul.f32 %v198, %v358
    %v399 = vmul.f32 %v199, %v359
    %v400 = vmul.f32 %v200, %v360
    %v401 = vmul.f32 %v201, %v361
    %v402 = vmul.f32 %v202, %v362
    %v403 = vmul.f32 %v203, %v363
    %v404 = vmul.f32 %v204, %v364
    %v405 = vmul.f32 %v205, %v365
    %v406 = vmul.f32 %v206, %v366
    %v407 = vmul.f32 %v207, %v367
    %v408 = vmul.f32 %v208, %v368
    %v409 = vmul.f32 %v209, %v369
    %v410 = vmul.f32 %v210, %v370
    %v411 = vmul.f32 %v211, %v371
    %v412 = vmul.f32 %v212, %v372
    %v413 = vmul.f32 %v213, %v373
    %v414 = vmul.f32 %v214, %v374
    %v415 = vmul.f32 %v215, %v375
    %v416 = vmul.f32 %v216, %v376
    %v417 = vmul.f32 %v217, %v377
    %v418 = vmul.f32 %v218, %v378
    %v419 = vmul.f32 %v219, %v379
    %v420 = vmul.f32 %v220, %v380
    %v421 = vmul.f32 %v221, %v381
    %v422 = vmul.f32 %v222, %v382
    %v423 = vmul.f32 %v223, %v383
    %v424 = vmul.f32 %v224, %v384
    %v425 = vsub.f32 1.0, %v385
    %v426 = vsub.f32 1.0, %v386
    %v427 = vsub.f32 1.0, %v387
    %v428 = vsub.f32 1.0, %v388
    %v429 = vsub.f32 1.0, %v389
    %v430 = vsub.f32 1.0, %v390
    %v431 = vsub.f32 1.0, %v391
    %v432 = vsub.f32 1.0, %v392
    %v433 = vsub.f32 1.0, %v393
    %v434 = vsub.f32 1.0, %v394
    %v435 = vsub.f32 1.0, %v395
    %v436 = vsub.f32 1.0, %v396
    %v437 = vsub.f32 1.0, %v397
    %v438 = vsub.f32 1.0, %v398
    %v439 = vsub.f32 1.0, %v399
    %v440 = vsub.f32 1.0, %v400
    %v441 = vsub.f32 1.0, %v401
    %v442 = vsub.f32 1.0, %v402
    %v443 = vsub.f32 1.0, %v403
    %v444 = vsub.f32 1.0, %v404
    %v445 = vsub.f32 1.0, %v405
    %v446 = vsub.f32 1.0, %v406
    %v447 = vsub.f32 1.0, %v407
    %v448 = vsub.f32 1.0, %v408
    %v449 = vsub.f32 1.0, %v409
    %v450 = vsub.f32 1.0, %v410
    %v451 = vsub.f32 1.0, %v411
    %v452 = vsub.f32 1.0, %v412
    %v453 = vsub.f32 1.0, %v413
    %v454 = vsub.f32 1.0, %v414
    %v455 = vsub.f32 1.0, %v415
    %v456 = vsub.f32 1.0, %v416
    %v457 = vsub.f32 1.0, %v417
    %v458 = vsub.f32 1.0, %v418
    %v459 = vsub.f32 1.0, %v419
    %v460 = vsub.f32 1.0, %v420
    %v461 = vsub.f32 1.0, %v421
    %v462 = vsub.f32 1.0, %v422
    %v463 = vsub.f32 1.0, %v423
    %v464 = vsub.f32 1.0, %v424
    %vm465 = vcmp.lt.f32.partialorder %v25, 3.5
    %vm466 = vcmp.lt.f32.partialorder %v26, 3.5
    %vm467 = vcmp.lt.f32.partialorder %v27, 3.5
    %vm468 = vcmp.lt.f32.partialorder %v28, 3.5
    %vm469 = vcmp.lt.f32.partialorder %v29, 3.5
    %vm470 = vcmp.lt.f32.partialorder %v30, 3.5
    %vm471 = vcmp.lt.f32.partialorder %v31, 3.5
    %vm472 = vcmp.lt.f32.partialorder %v32, 3.5
    %vm473 = vcmp.lt.f32.partialorder %v33, 3.5
    %vm474 = vcmp.lt.f32.partialorder %v34, 3.5
    %vm475 = vcmp.lt.f32.partialorder %v35, 3.5
    %vm476 = vcmp.lt.f32.partialorder %v36, 3.5
    %vm477 = vcmp.lt.f32.partialorder %v37, 3.5
    %vm478 = vcmp.lt.f32.partialorder %v38, 3.5
    %vm479 = vcmp.lt.f32.partialorder %v39, 3.5
    %vm480 = vcmp.lt.f32.partialorder %v40, 3.5
    %vm481 = vcmp.lt.f32.partialorder %v41, 3.5
    %vm482 = vcmp.lt.f32.partialorder %v42, 3.5
    %vm483 = vcmp.lt.f32.partialorder %v43, 3.5
    %vm484 = vcmp.lt.f32.partialorder %v44, 3.5
    %vm485 = vcmp.lt.f32.partialorder %v45, 3.5
    %vm486 = vcmp.lt.f32.partialorder %v46, 3.5
    %vm487 = vcmp.lt.f32.partialorder %v47, 3.5
    %vm488 = vcmp.lt.f32.partialorder %v48, 3.5
    %vm489 = vcmp.lt.f32.partialorder %v49, 3.5
    %vm490 = vcmp.lt.f32.partialorder %v50, 3.5
    %vm491 = vcmp.lt.f32.partialorder %v51, 3.5
    %vm492 = vcmp.lt.f32.partialorder %v52, 3.5
    %vm493 = vcmp.lt.f32.partialorder %v53, 3.5
    %vm494 = vcmp.lt.f32.partialorder %v54, 3.5
    %vm495 = vcmp.lt.f32.partialorder %v55, 3.5
    %vm496 = vcmp.lt.f32.partialorder %v56, 3.5
    %vm497 = vcmp.lt.f32.partialorder %v57, 3.5
    %vm498 = vcmp.lt.f32.partialorder %v58, 3.5
    %vm499 = vcmp.lt.f32.partialorder %v59, 3.5
    %vm500 = vcmp.lt.f32.partialorder %v60, 3.5
    %vm501 = vcmp.lt.f32.partialorder %v61, 3.5
    %vm502 = vcmp.lt.f32.partialorder %v62, 3.5
    %vm503 = vcmp.lt.f32.partialorder %v63, 3.5
    %vm504 = vcmp.lt.f32.partialorder %v64, 3.5
    %v505 = vsel %vm465, %v425, 0.0
    %v506 = vsel %vm466, %v426, 0.0
    %v507 = vsel %vm467, %v427, 0.0
    %v508 = vsel %vm468, %v428, 0.0
    %v509 = vsel %vm469, %v429, 0.0
    %v510 = vsel %vm470, %v430, 0.0
    %v511 = vsel %vm471, %v431, 0.0
    %v512 = vsel %vm472, %v432, 0.0
    %v513 = vsel %vm473, %v433, 0.0
    %v514 = vsel %vm474, %v434, 0.0
    %v515 = vsel %vm475, %v435, 0.0
    %v516 = vsel %vm476, %v436, 0.0
    %v517 = vsel %vm477, %v437, 0.0
    %v518 = vsel %vm478, %v438, 0.0
    %v519 = vsel %vm479, %v439, 0.0
    %v520 = vsel %vm480, %v440, 0.0
    %v521 = vsel %vm481, %v441, 0.0
    %v522 = vsel %vm482, %v442, 0.0
    %v523 = vsel %vm483, %v443, 0.0
    %v524 = vsel %vm484, %v444, 0.0
    %v525 = vsel %vm485, %v445, 0.0
    %v526 = vsel %vm486, %v446, 0.0
    %v527 = vsel %vm487, %v447, 0.0
    %v528 = vsel %vm488, %v448, 0.0
    %v529 = vsel %vm489, %v449, 0.0
    %v530 = vsel %vm490, %v450, 0.0
    %v531 = vsel %vm491, %v451, 0.0
    %v532 = vsel %vm492, %v452, 0.0
    %v533 = vsel %vm493, %v453, 0.0
    %v534 = vsel %vm494, %v454, 0.0
    %v535 = vsel %vm495, %v455, 0.0
    %v536 = vsel %vm496, %v456, 0.0
    %v537 = vsel %vm497, %v457, 0.0
    %v538 = vsel %vm498, %v458, 0.0
    %v539 = vsel %vm499, %v459, 0.0
    %v540 = vsel %vm500, %v460, 0.0
    %v541 = vsel %vm501, %v461, 0.0
    %v542 = vsel %vm502, %v462, 0.0
    %v543 = vsel %vm503, %v463, 0.0
    %v544 = vsel %vm504, %v464, 0.0
    %545 = vst [vmem:[#allocation5] sm:$0xff] %v505
    %546 = vst [vmem:[#allocation5 + $0x8] sm:$0xff] %v506
    %547 = vst [vmem:[#allocation5 + $0x10] sm:$0xff] %v507
    %548 = vst [vmem:[#allocation5 + $0x18] sm:$0xff] %v508
    %549 = vst [vmem:[#allocation5 + $0x20] sm:$0xff] %v509
    %550 = vst [vmem:[#allocation5 + $0x28] sm:$0xff] %v510
    %551 = vst [vmem:[#allocation5 + $0x30] sm:$0xff] %v511
    %552 = vst [vmem:[#allocation5 + $0x38] sm:$0xff] %v512
    %553 = vst [vmem:[#allocation5 + $0x40] sm:$0xff] %v513
    %554 = vst [vmem:[#allocation5 + $0x48] sm:$0xff] %v514
    %555 = vst [vmem:[#allocation5 + $0x50] sm:$0xff] %v515
    %556 = vst [vmem:[#allocation5 + $0x58] sm:$0xff] %v516
    %557 = vst [vmem:[#allocation5 + $0x60] sm:$0xff] %v517
    %558 = vst [vmem:[#allocation5 + $0x68] sm:$0xff] %v518
    %559 = vst [vmem:[#allocation5 + $0x70] sm:$0xff] %v519
    %560 = vst [vmem:[#allocation5 + $0x78] sm:$0xff] %v520
    %561 = vst [vmem:[#allocation5 + $0x80] sm:$0xff] %v521
    %562 = vst [vmem:[#allocation5 + $0x88] sm:$0xff] %v522
    %563 = vst [vmem:[#allocation5 + $0x90] sm:$0xff] %v523
    %564 = vst [vmem:[#allocation5 + $0x98] sm:$0xff] %v524
    %565 = vst [vmem:[#allocation5 + $0xa0] sm:$0xff] %v525
    %566 = vst [vmem:[#allocation5 + $0xa8] sm:$0xff] %v526
    %567 = vst [vmem:[#allocation5 + $0xb0] sm:$0xff] %v527
    %568 = vst [vmem:[#allocation5 + $0xb8] sm:$0xff] %v528
    %569 = vst [vmem:[#allocation5 + $0xc0] sm:$0xff] %v529
    %570 = vst [vmem:[#allocation5 + $0xc8] sm:$0xff] %v530
    %571 = vst [vmem:[#allocation5 + $0xd0] sm:$0xff] %v531
    %572 = vst [vmem:[#allocation5 + $0xd8] sm:$0xff] %v532
    %573 = vst [vmem:[#allocation5 + $0xe0] sm:$0xff] %v533
    %574 = vst [vmem:[#allocation5 + $0xe8] sm:$0xff] %v534
    %575 = vst [vmem:[#allocation5 + $0xf0] sm:$0xff] %v535
    %576 = vst [vmem:[#allocation5 + $0xf8] sm:$0xff] %v536
    %577 = vst [vmem:[#allocation5 + $0x100] sm:$0xff] %v537
    %578 = vst [vmem:[#allocation5 + $0x108] sm:$0xff] %v538
    %579 = vst [vmem:[#allocation5 + $0x110] sm:$0xff] %v539
    %580 = vst [vmem:[#allocation5 + $0x118] sm:$0xff] %v540
    %581 = vst [vmem:[#allocation5 + $0x120] sm:$0xff] %v541
    %582 = vst [vmem:[#allocation5 + $0x128] sm:$0xff] %v542
    %583 = vst [vmem:[#allocation5 + $0x130] sm:$0xff] %v543
    %584 = vst [vmem:[#allocation5 + $0x138] sm:$0xff] %v544
    // Predicated region
    $region10: #{polynomial_cutoff.1} parent=1 // pred_check
      _
    $region11: #{polynomial_cutoff.1} parent=1 // pred_check_branch
      %586 = sbr.rel (0) target = $region13
    $region12: #{polynomial_cutoff.1} parent=1 // pred_region
      %588 = vsyncadd [#allocation4], 0
      %s589 = sshll.u32 [#allocation5], 4
      %s590 = int_to_ptr.vmem [resolvable:$true] %s589
      %s591 = sshll.u32 %s1, 4
      %s592 = int_to_ptr.hbm [resolvable:$true] %s591
      %597 = dma.vmem_to_hbm [thread:$0]  %s590, 5120, %s592, [#allocation4], 1024, 1024, 64
    $region13: #{polynomial_cutoff.1} parent=1 // pred_fallthru
      _
    // Predicated region
    $region14: #{polynomial_cutoff.1} parent=1 // pred_check
      _
    $region15: #{polynomial_cutoff.1} parent=1 // pred_check_branch
      %599 = sbr.rel (0) target = $region17
    $region16: #{polynomial_cutoff.1} parent=1 // pred_region
      %601 = dma.done [#allocation4], 5120
    $region17: #{polynomial_cutoff.1} parent=1 // pred_fallthru
      _
    %602 = vsyncpa [#allocation3], 1
    %603 = vsyncpa [#allocation4], 1

</llo_original>
